<compile_context>
chip_gen: v6e
topology: v6e:2x2x1
jax: 0.10.0
libtpu: 0.0.40
codegen_flags: <defaults>
</compile_context>

<pallas_src>
import math
import functools

import jax
import jax.numpy as jnp
from jax.experimental import pallas as pl
from jax.experimental.pallas import tpu as pltpu


# ---------------------------------------------------------------------------
# Kernel: one grid step == one row tile of the flattened input; all weights
# are resident in VMEM (constant index_map) and the intermediate activation
# never leaves VMEM.
# ---------------------------------------------------------------------------
def _head_kernel(*refs, num_layers: int, compute_dtype):
    x_ref = refs[0]
    out_ref = refs[-1]
    wb_refs = refs[1:-1]  # interleaved (w0, b0, w1, b1, ...)

    h = x_ref[...]
    for i in range(num_layers):  # static Python loop (num_layers is tiny)
        w = wb_refs[2 * i][...]
        b = wb_refs[2 * i + 1][...]
        h = jnp.dot(h.astype(compute_dtype), w.astype(compute_dtype),
                    preferred_element_type=jnp.float32) + b.astype(jnp.float32)
        if i < num_layers - 1:
            # exact GELU (PyTorch nn.GELU default); Dropout is identity at inference.
            h = 0.5 * h * (1.0 + jax.lax.erf(h * (1.0 / math.sqrt(2.0))))
    out_ref[...] = h.astype(out_ref.dtype)


# ---------------------------------------------------------------------------
# Wrapper
# ---------------------------------------------------------------------------
def world_model_head(x, params, *, block_rows=256, compute_dtype=jnp.float32):
    """params: list of (w, b) pairs, w: (in_features, out_features), b: (1, out_features)."""
    num_layers = len(params)
    *lead, d_in = x.shape
    m = math.prod(lead) if lead else 1
    d_out = params[-1][0].shape[1]

    x2 = x.reshape(m, d_in)

    # Row tile: multiple of the 8-sublane granule; pad rows so the grid is exact.
    mp = -(-m // 8) * 8
    tm = min(block_rows, mp)          # block_rows and mp are both multiples of 8
    mp = -(-mp // tm) * tm
    if mp != m:
        x2 = jnp.pad(x2, ((0, mp - m), (0, 0)))

    flat_wb = [a for wb in params for a in wb]

    in_specs = [pl.BlockSpec((tm, d_in), lambda i: (i, 0))]
    for a in flat_wb:
        # full-array blocks with constant index_map -> fetched once, resident
        in_specs.append(pl.BlockSpec(a.shape, lambda i: (0, 0)))
    out_spec = pl.BlockSpec((tm, d_out), lambda i: (i, 0))

    # Explicit VMEM budget: weights + io tiles (double-buffered) + activation slack.
    bytes_per = 4
    widths = [d_in] + [w.shape[1] for w, _ in params]
    weight_bytes = sum(int(a.size) * bytes_per for a in flat_wb)
    io_bytes = tm * (d_in + d_out) * bytes_per
    act_bytes = tm * max(widths) * bytes_per
    est = 2 * (weight_bytes + io_bytes) + 4 * act_bytes
    vmem_limit = int(min(max(est, 16 * 1024 * 1024), 56 * 1024 * 1024))

    kernel = functools.partial(_head_kernel, num_layers=num_layers,
                               compute_dtype=compute_dtype)

    out = pl.pallas_call(
        kernel,
        out_shape=jax.ShapeDtypeStruct((mp, d_out), x.dtype),
        grid_spec=pltpu.PrefetchScalarGridSpec(
            num_scalar_prefetch=0,
            grid=(mp // tm,),
            in_specs=in_specs,
            out_specs=out_spec,
        ),
        compiler_params=pltpu.CompilerParams(
            dimension_semantics=("parallel",),
            vmem_limit_bytes=vmem_limit,
        ),
    )(x2, *flat_wb)

    return out[:m].reshape(*lead, d_out)


# ---------------------------------------------------------------------------
# Parameter init mirroring nn.Linear layer construction in WorldModelHead.
# ---------------------------------------------------------------------------
def init_params(key, input_dim, output_dim, hidden_dim=None, num_layers=2):
    hidden_dim = hidden_dim or input_dim
    shapes = []
    for i in range(num_layers):
        if i == 0:
            shapes.append((input_dim, hidden_dim))
        elif i == num_layers - 1:
            shapes.append((hidden_dim, output_dim))
        else:
            shapes.append((hidden_dim, hidden_dim))
    keys = jax.random.split(key, num_layers)
    params = []
    for k, (fan_in, fan_out) in zip(keys, shapes):
        kw, kb = jax.random.split(k)
        bound = 1.0 / math.sqrt(fan_in)
        w = jax.random.uniform(kw, (fan_in, fan_out), jnp.float32, -bound, bound)
        b = jax.random.uniform(kb, (1, fan_out), jnp.float32, -bound, bound)
        params.append((w, b))
    return params


def _reference(x, params):
    h = x
    n = len(params)
    for i, (w, b) in enumerate(params):
        h = h @ w + b[0]
        if i < n - 1:
            h = jax.nn.gelu(h, approximate=False)   # exact erf GELU; dropout = identity
    return h


if __name__ == "__main__":
    B, S, D_IN, D_HID, D_OUT = 2, 8, 32, 64, 16
    key = jax.random.PRNGKey(0)
    kx, kp = jax.random.split(key)
    x = jax.random.normal(kx, (B, S, D_IN), dtype=jnp.float32)
    params = init_params(kp, input_dim=D_IN, output_dim=D_OUT,
                         hidden_dim=D_HID, num_layers=2)

    out = world_model_head(x, params)
    jax.block_until_ready(out)

    ref = _reference(x, params)
    assert out.shape == (B, S, D_OUT)
    assert bool(jnp.all(jnp.isfinite(out)))
    assert bool(jnp.allclose(out, ref, atol=1e-5, rtol=1e-5))
    print("KERNEL_OK")
</pallas_src>

<mosaic_0001>
module attributes {stable_mosaic.version = 11 : i64} {
  func.func @_head_kernel(%arg0: i32, %arg1: memref<16x32xf32, #tpu.memory_space<vmem>>, %arg2: memref<32x64xf32, #tpu.memory_space<vmem>>, %arg3: memref<1x64xf32, #tpu.memory_space<vmem>>, %arg4: memref<64x16xf32, #tpu.memory_space<vmem>>, %arg5: memref<1x16xf32, #tpu.memory_space<vmem>>, %arg6: memref<16x16xf32, #tpu.memory_space<vmem>>) attributes {dimension_semantics = [#tpu.dimension_semantics<parallel>], iteration_bounds = array<i64: 1>, scalar_prefetch = 0 : i64, scratch_operands = 0 : i64, tpu.core_type = #tpu.core_type<tc>, window_params = [{transform_indices = @transform_0, window_bounds = array<i64: 16, 32>}, {pipeline_mode = #tpu.pipeline_mode<synchronous>, transform_indices = @transform_1, window_bounds = array<i64: 32, 64>}, {pipeline_mode = #tpu.pipeline_mode<synchronous>, transform_indices = @transform_2, window_bounds = array<i64: 1, 64>}, {pipeline_mode = #tpu.pipeline_mode<synchronous>, transform_indices = @transform_3, window_bounds = array<i64: 64, 16>}, {pipeline_mode = #tpu.pipeline_mode<synchronous>, transform_indices = @transform_4, window_bounds = array<i64: 1, 16>}, {transform_indices = @transform_5, window_bounds = array<i64: 16, 16>}]} {
    %c0 = arith.constant 0 : index
    %c0_0 = arith.constant 0 : index
    %0 = vector.load %arg1[%c0, %c0_0] : memref<16x32xf32, #tpu.memory_space<vmem>>, vector<16x32xf32>
    %c0_1 = arith.constant 0 : index
    %c0_2 = arith.constant 0 : index
    %1 = vector.load %arg2[%c0_1, %c0_2] : memref<32x64xf32, #tpu.memory_space<vmem>>, vector<32x64xf32>
    %c0_3 = arith.constant 0 : index
    %c0_4 = arith.constant 0 : index
    %2 = vector.load %arg3[%c0_3, %c0_4] : memref<1x64xf32, #tpu.memory_space<vmem>>, vector<1x64xf32>
    %cst = arith.constant dense<0.000000e+00> : vector<16x64xf32>
    %3 = tpu.matmul %0, %1, %cst {dimension_numbers = #tpu.dot_dimension_numbers<[1], [0], [0], [1], [0, 0, 1, 1], [], []>} : vector<16x32xf32>, vector<32x64xf32>, vector<16x64xf32> -> vector<16x64xf32>
    %4 = vector.broadcast %2 : vector<1x64xf32> to vector<16x64xf32>
    %5 = arith.addf %3, %4 : vector<16x64xf32>
    %cst_5 = arith.constant 5.000000e-01 : f32
    %6 = vector.broadcast %cst_5 : f32 to vector<16x64xf32>
    %7 = arith.mulf %6, %5 : vector<16x64xf32>
    %cst_6 = arith.constant 0.707106769 : f32
    %8 = vector.broadcast %cst_6 : f32 to vector<16x64xf32>
    %9 = arith.mulf %5, %8 : vector<16x64xf32>
    %10 = math.erf %9 : vector<16x64xf32>
    %cst_7 = arith.constant 1.000000e+00 : f32
    %11 = vector.broadcast %cst_7 : f32 to vector<16x64xf32>
    %12 = arith.addf %11, %10 : vector<16x64xf32>
    %13 = arith.mulf %7, %12 : vector<16x64xf32>
    %c0_8 = arith.constant 0 : index
    %c0_9 = arith.constant 0 : index
    %14 = vector.load %arg4[%c0_8, %c0_9] : memref<64x16xf32, #tpu.memory_space<vmem>>, vector<64x16xf32>
    %c0_10 = arith.constant 0 : index
    %c0_11 = arith.constant 0 : index
    %15 = vector.load %arg5[%c0_10, %c0_11] : memref<1x16xf32, #tpu.memory_space<vmem>>, vector<1x16xf32>
    %cst_12 = arith.constant dense<0.000000e+00> : vector<16x16xf32>
    %16 = tpu.matmul %13, %14, %cst_12 {dimension_numbers = #tpu.dot_dimension_numbers<[1], [0], [0], [1], [0, 0, 1, 1], [], []>} : vector<16x64xf32>, vector<64x16xf32>, vector<16x16xf32> -> vector<16x16xf32>
    %17 = vector.broadcast %15 : vector<1x16xf32> to vector<16x16xf32>
    %18 = arith.addf %16, %17 : vector<16x16xf32>
    %c0_13 = arith.constant 0 : index
    %c0_14 = arith.constant 0 : index
    %19 = vector.load %arg6[%c0_13, %c0_14] : memref<16x16xf32, #tpu.memory_space<vmem>>, vector<16x16xf32>
    tpu.vector_store %arg6[%c0_13, %c0_14], %18 {strides = array<i32>} : memref<16x16xf32, #tpu.memory_space<vmem>>, vector<16x16xf32>,
    return
  }
  func.func @transform_0(%arg0: i32) -> (i32, i32) {
    %c0_i32 = arith.constant 0 : i32
    %c0_i32_0 = arith.constant 0 : i32
    return %arg0, %c0_i32 : i32, i32
  }
  func.func @transform_1(%arg0: i32) -> (i32, i32) {
    %c0_i32 = arith.constant 0 : i32
    %c0_i32_0 = arith.constant 0 : i32
    %c0_i32_1 = arith.constant 0 : i32
    return %c0_i32, %c0_i32_0 : i32, i32
  }
  func.func @transform_2(%arg0: i32) -> (i32, i32) {
    %c0_i32 = arith.constant 0 : i32
    %c0_i32_0 = arith.constant 0 : i32
    %c0_i32_1 = arith.constant 0 : i32
    return %c0_i32, %c0_i32_0 : i32, i32
  }
  func.func @transform_3(%arg0: i32) -> (i32, i32) {
    %c0_i32 = arith.constant 0 : i32
    %c0_i32_0 = arith.constant 0 : i32
    %c0_i32_1 = arith.constant 0 : i32
    return %c0_i32, %c0_i32_0 : i32, i32
  }
  func.func @transform_4(%arg0: i32) -> (i32, i32) {
    %c0_i32 = arith.constant 0 : i32
    %c0_i32_0 = arith.constant 0 : i32
    %c0_i32_1 = arith.constant 0 : i32
    return %c0_i32, %c0_i32_0 : i32, i32
  }
  func.func @transform_5(%arg0: i32) -> (i32, i32) {
    %c0_i32 = arith.constant 0 : i32
    %c0_i32_0 = arith.constant 0 : i32
    return %arg0, %c0_i32 : i32, i32
  }
}

</mosaic_0001>

<llo_original>
// kernel: tpu_custom_call.1
$region0: #{tpu_custom_call.1}
  #allocation0 [shape = 'u32[]', space=smem, size = 0x4, offset = 0x4, fixed_abs, tag = 'smem constant byte address 0x4 - core index']
  #allocation1 [shape = 'u32[144,128]{1,0:T(1,128)}', space=vmem, size = 0x12000, scoped, tag = 'internal scratch']
  %s0 = inlined_call_operand.vmem [shape: f32[16,32], index: 0, kind: input, shape index: {}]
  %s1 = inlined_call_operand.vmem [shape: f32[32,64], index: 1, kind: input, shape index: {}]
  %s2 = inlined_call_operand.vmem [shape: f32[1,64], index: 2, kind: input, shape index: {}]
  %s3 = inlined_call_operand.vmem [shape: f32[64,16], index: 3, kind: input, shape index: {}]
  %s4 = inlined_call_operand.vmem [shape: f32[1,16], index: 4, kind: input, shape index: {}]
  %s5 = inlined_call_operand.hbm [shape: f32[16,16], index: 5, kind: output, shape index: {}]
  %s6 = sld [smem:[#allocation0]]
  $region30: #{tpu_custom_call.1} parent=0
    _
  %s8 = ssub.s32 1, %s6
  %s9 = scalar_select 0, %s8, %s6
  $region1: #{tpu_custom_call.1} parent=0
    #allocation2 [shape = 'u8[8192]{0}', space=vmem, size = 0x2000, scoped, tag = 'output window, operand 0, single buffered']
    #allocation3 [shape = 's32[1]{0}', space=sflag, size = 0x4, scoped, tag = 'scoped memory for tpu_custom_call.1']
    %10 = vsyncpa [#allocation3], 0
    // Predicated region
    $region2: #{tpu_custom_call.1} parent=1 // pred_check
      _
    $region3: #{tpu_custom_call.1} parent=1 // pred_check_branch
      %12 = sbr.rel (0) target = $region5
    $region4: #{tpu_custom_call.1} parent=1 // pred_region
      _
    $region5: #{tpu_custom_call.1} parent=1 // pred_fallthru
      _
    // Predicated region
    $region6: #{tpu_custom_call.1} parent=1 // pred_check
      _
    $region7: #{tpu_custom_call.1} parent=1 // pred_check_branch
      %14 = sbr.rel (0) target = $region9
    $region8: #{tpu_custom_call.1} parent=1 // pred_region
      _
    $region9: #{tpu_custom_call.1} parent=1 // pred_fallthru
      _
    // Predicated region
    $region10: #{tpu_custom_call.1} parent=1 // pred_check
      _
    $region11: #{tpu_custom_call.1} parent=1 // pred_check_branch
      %16 = sbr.rel (0) target = $region13
    $region12: #{tpu_custom_call.1} parent=1 // pred_region
      _
    $region13: #{tpu_custom_call.1} parent=1 // pred_fallthru
      _
    // Predicated region
    $region14: #{tpu_custom_call.1} parent=1 // pred_check
      _
    $region15: #{tpu_custom_call.1} parent=1 // pred_check_branch
      %18 = sbr.rel (0) target = $region17
    $region16: #{tpu_custom_call.1} parent=1 // pred_region
      _
    $region17: #{tpu_custom_call.1} parent=1 // pred_fallthru
      _
    // Predicated region
    $region18: #{tpu_custom_call.1} parent=1 // pred_check
      _
    $region19: #{tpu_custom_call.1} parent=1 // pred_check_branch
      %20 = sbr.rel (0) target = $region21
    $region20: #{tpu_custom_call.1} parent=1 // pred_region
      _
    $region21: #{tpu_custom_call.1} parent=1 // pred_fallthru
      _
    %v21 = vld [vmem:[%s0] sm:$0xff]
    %v22 = vld [vmem:[%s0 + $0x8] sm:$0xff]
    %v23 = vld [vmem:[%s1] sm:$0xff]
    %v24 = vld [vmem:[%s1 + $0x8] sm:$0xff]
    %v25 = vld [vmem:[%s1 + $0x10] sm:$0xff]
    %v26 = vld [vmem:[%s1 + $0x18] sm:$0xff]
    %v27 = vld [vmem:[%s2] sm:$0x1]
    %v29 = vlaneseq
    %v30 = vshrl.u32 %v29, 7
    %v31 = vsub.s32 0, %v30
    %v32 = vrot.slane %v27, %v31
    %vm34 = vcmask 261120
    %v36 = vsel %vm34, %v21, 0
    %v39 = vsel %vm34, %v22, 0
    %41 = vmatprep.subr.mxu0 0.0
    %42 = vmatpush1.msra.mxu0 0.0
    %43 = vmatprep.subr.mxu0 0.0
    %44 = vmatpush1.msra.mxu0 0.0
    %45 = vmatprep.subr.mxu0 0.0
    %46 = vmatpush1.msra.mxu0 0.0
    %47 = vmatprep.subr.mxu0 0.0
    %48 = vmatpush1.msra.mxu0 0.0
    %49 = vmatprep.subr.mxu0 0.0
    %50 = vmatpush1.msra.mxu0 0.0
    %51 = vmatprep.subr.mxu0 0.0
    %52 = vmatpush1.msra.mxu0 0.0
    %53 = vmatprep.subr.mxu0 0.0
    %54 = vmatpush1.msra.mxu0 0.0
    %55 = vmatprep.subr.mxu0 0.0
    %56 = vmatpush1.msra.mxu0 0.0
    %57 = vmatprep.subr.mxu0 0.0
    %58 = vmatpush1.msra.mxu0 0.0
    %59 = vmatprep.subr.mxu0 0.0
    %60 = vmatpush1.msra.mxu0 0.0
    %61 = vmatprep.subr.mxu0 0.0
    %62 = vmatpush1.msra.mxu0 0.0
    %63 = vmatprep.subr.mxu0 0.0
    %64 = vmatpush1.msra.mxu0 0.0
    %65 = vmatprep.subr.mxu0 0.0
    %66 = vmatpush1.msra.mxu0 %v26
    %67 = vmatprep.subr.mxu0 0.0
    %68 = vmatpush1.msra.mxu0 %v25
    %69 = vmatprep.subr.mxu0 0.0
    %70 = vmatpush1.msra.mxu0 %v24
    %71 = vmatprep.subr.mxu0 0.0
    %72 = vmatpush1.msra.mxu0 %v23
    %73 = vmatprep.subr.mxu0 0.0
    %74 = vmatpush2.msra.mxu0 0.0
    %75 = vmatprep.subr.mxu0 0.0
    %76 = vmatpush2.msra.mxu0 0.0
    %77 = vmatprep.subr.mxu0 0.0
    %78 = vmatpush2.msra.mxu0 0.0
    %79 = vmatprep.subr.mxu0 0.0
    %80 = vmatpush2.msra.mxu0 0.0
    %81 = vmatprep.subr.mxu0 0.0
    %82 = vmatpush2.msra.mxu0 0.0
    %83 = vmatprep.subr.mxu0 0.0
    %84 = vmatpush2.msra.mxu0 0.0
    %85 = vmatprep.subr.mxu0 0.0
    %86 = vmatpush2.msra.mxu0 0.0
    %87 = vmatprep.subr.mxu0 0.0
    %88 = vmatpush2.msra.mxu0 0.0
    %89 = vmatprep.subr.mxu0 0.0
    %90 = vmatpush2.msra.mxu0 0.0
    %91 = vmatprep.subr.mxu0 0.0
    %92 = vmatpush2.msra.mxu0 0.0
    %93 = vmatprep.subr.mxu0 0.0
    %94 = vmatpush2.msra.mxu0 0.0
    %95 = vmatprep.subr.mxu0 0.0
    %96 = vmatpush2.msra.mxu0 0.0
    %97 = vmatprep.subr.mxu0 0.0
    %98 = vmatpush2.msra.mxu0 0.0
    %99 = vmatprep.subr.mxu0 0.0
    %100 = vmatpush2.msra.mxu0 0.0
    %101 = vmatprep.subr.mxu0 0.0
    %102 = vmatpush2.msra.mxu0 0.0
    %103 = vmatprep.subr.mxu0 0.0
    %104 = vmatpush2.msra.mxu0 0.0
    %105 = vmatprep.mubr.f32.mxu0 0.0
    %106 = vmatmul.mubr.f32.gmra.mxu0 %v36
    %v107 = vpop.f32.mrf.mxu0
    %v108 = vadd.f32 %v32, %v107
    %v109 = vpop.f32.mrf.mxu0
    %110 = vmatprep.mubr.f32.mxu0 0.0
    %111 = vmatmul.mubr.f32.gmra.mxu0 %v39
    %v112 = vpop.f32.mrf.mxu0
    %v113 = vadd.f32 %v32, %v112
    %v114 = vpop.f32.mrf.mxu0
    %115 = vdwg.mxu0
    %v116 = vmul.f32 %v108, 0.5
    %v117 = vmul.f32 %v113, 0.5
    %v118 = vmul.f32 %v108, 0.70710677
    %v119 = vmul.f32 %v113, 0.70710677
    %v120 = verf.f32.pop %v118
    %v121 = verf.f32.pop %v119
    %v122 = vadd.f32 %v120, 1.0
    %v123 = vadd.f32 %v121, 1.0
    %v124 = vmul.f32 %v116, %v122
    %v125 = vmul.f32 %v117, %v123
    %v126 = vld [vmem:[%s3] sm:$0xff]
    %v127 = vld [vmem:[%s3 + $0x8] sm:$0xff]
    %v128 = vld [vmem:[%s3 + $0x10] sm:$0xff]
    %v129 = vld [vmem:[%s3 + $0x18] sm:$0xff]
    %v130 = vld [vmem:[%s3 + $0x20] sm:$0xff]
    %v131 = vld [vmem:[%s3 + $0x28] sm:$0xff]
    %v132 = vld [vmem:[%s3 + $0x30] sm:$0xff]
    %v133 = vld [vmem:[%s3 + $0x38] sm:$0xff]
    %v134 = vld [vmem:[%s4] sm:$0x1]
    %v136 = vlaneseq
    %v137 = vshrl.u32 %v136, 7
    %v138 = vsub.s32 0, %v137
    %v139 = vrot.slane %v134, %v138
    %vm141 = vcmask 523264
    %v143 = vsel %vm141, %v124, 0
    %v146 = vsel %vm141, %v125, 0
    %148 = vmatprep.subr.mxu0 0.0
    %149 = vmatpush1.msra.mxu0 0.0
    %150 = vmatprep.subr.mxu0 0.0
    %151 = vmatpush1.msra.mxu0 0.0
    %152 = vmatprep.subr.mxu0 0.0
    %153 = vmatpush1.msra.mxu0 0.0
    %154 = vmatprep.subr.mxu0 0.0
    %155 = vmatpush1.msra.mxu0 0.0
    %156 = vmatprep.subr.mxu0 0.0
    %157 = vmatpush1.msra.mxu0 0.0
    %158 = vmatprep.subr.mxu0 0.0
    %159 = vmatpush1.msra.mxu0 0.0
    %160 = vmatprep.subr.mxu0 0.0
    %161 = vmatpush1.msra.mxu0 0.0
    %162 = vmatprep.subr.mxu0 0.0
    %163 = vmatpush1.msra.mxu0 0.0
    %164 = vmatprep.subr.mxu0 0.0
    %165 = vmatpush1.msra.mxu0 %v133
    %166 = vmatprep.subr.mxu0 0.0
    %167 = vmatpush1.msra.mxu0 %v132
    %168 = vmatprep.subr.mxu0 0.0
    %169 = vmatpush1.msra.mxu0 %v131
    %170 = vmatprep.subr.mxu0 0.0
    %171 = vmatpush1.msra.mxu0 %v130
    %172 = vmatprep.subr.mxu0 0.0
    %173 = vmatpush1.msra.mxu0 %v129
    %174 = vmatprep.subr.mxu0 0.0
    %175 = vmatpush1.msra.mxu0 %v128
    %176 = vmatprep.subr.mxu0 0.0
    %177 = vmatpush1.msra.mxu0 %v127
    %178 = vmatprep.subr.mxu0 0.0
    %179 = vmatpush1.msra.mxu0 %v126
    %180 = vmatprep.subr.mxu0 0.0
    %181 = vmatpush2.msra.mxu0 0.0
    %182 = vmatprep.subr.mxu0 0.0
    %183 = vmatpush2.msra.mxu0 0.0
    %184 = vmatprep.subr.mxu0 0.0
    %185 = vmatpush2.msra.mxu0 0.0
    %186 = vmatprep.subr.mxu0 0.0
    %187 = vmatpush2.msra.mxu0 0.0
    %188 = vmatprep.subr.mxu0 0.0
    %189 = vmatpush2.msra.mxu0 0.0
    %190 = vmatprep.subr.mxu0 0.0
    %191 = vmatpush2.msra.mxu0 0.0
    %192 = vmatprep.subr.mxu0 0.0
    %193 = vmatpush2.msra.mxu0 0.0
    %194 = vmatprep.subr.mxu0 0.0
    %195 = vmatpush2.msra.mxu0 0.0
    %196 = vmatprep.subr.mxu0 0.0
    %197 = vmatpush2.msra.mxu0 0.0
    %198 = vmatprep.subr.mxu0 0.0
    %199 = vmatpush2.msra.mxu0 0.0
    %200 = vmatprep.subr.mxu0 0.0
    %201 = vmatpush2.msra.mxu0 0.0
    %202 = vmatprep.subr.mxu0 0.0
    %203 = vmatpush2.msra.mxu0 0.0
    %204 = vmatprep.subr.mxu0 0.0
    %205 = vmatpush2.msra.mxu0 0.0
    %206 = vmatprep.subr.mxu0 0.0
    %207 = vmatpush2.msra.mxu0 0.0
    %208 = vmatprep.subr.mxu0 0.0
    %209 = vmatpush2.msra.mxu0 0.0
    %210 = vmatprep.subr.mxu0 0.0
    %211 = vmatpush2.msra.mxu0 0.0
    %212 = vmatprep.mubr.f32.mxu0 0.0
    %213 = vmatmul.mubr.f32.gmra.mxu0 %v143
    %v214 = vpop.f32.mrf.mxu0
    %v215 = vadd.f32 %v139, %v214
    %v216 = vpop.f32.mrf.mxu0
    %217 = vmatprep.mubr.f32.mxu0 0.0
    %218 = vmatmul.mubr.f32.gmra.mxu0 %v146
    %v219 = vpop.f32.mrf.mxu0
    %v220 = vadd.f32 %v139, %v219
    %v221 = vpop.f32.mrf.mxu0
    %222 = vdwg.mxu0
    %vm223 = vcmask 130048
    %224 = vst.msk [vmem:[#allocation2] sm:$0xff] %vm223, %v215
    %225 = vst.msk [vmem:[#allocation2 + $0x8] sm:$0xff] %vm223, %v220
    // Predicated region
    $region22: #{tpu_custom_call.1} parent=1 // pred_check
      _
    $region23: #{tpu_custom_call.1} parent=1 // pred_check_branch
      %227 = sbr.rel (0) target = $region25
    $region24: #{tpu_custom_call.1} parent=1 // pred_region
      %s229 = ssub.s32 256, 256
      %230 = vsyncadd [#allocation3], %s229
      %s231 = sshll.u32 [#allocation2], 4
      %s232 = int_to_ptr.vmem [resolvable:$true] %s231
      %237 = dma.vmem_to_hbm [thread:$0]  %s232, 256, %s5, [#allocation3], 128, 128, 8
    $region25: #{tpu_custom_call.1} parent=1 // pred_fallthru
      _
    // Predicated region
    $region26: #{tpu_custom_call.1} parent=1 // pred_check
      _
    $region27: #{tpu_custom_call.1} parent=1 // pred_check_branch
      %239 = sbr.rel (0) target = $region29
    $region28: #{tpu_custom_call.1} parent=1 // pred_region
      %240 = dma.done [#allocation3], 256
    $region29: #{tpu_custom_call.1} parent=1 // pred_fallthru
      _
    %241 = vsyncpa [#allocation3], 1

</llo_original>
